<compile_context>
chip_gen: v5e
topology: v5e:2x2
jax: 0.10.0
libtpu: 0.0.40
codegen_flags: <defaults>
</compile_context>

<pallas_src>
import functools

import jax
import jax.numpy as jnp
from jax.experimental import pallas as pl
from jax.experimental.pallas import tpu as pltpu
import numpy as np


def yolo_head_kernel(coor_ref, pred_ref, out_ref, *, ratio, anchors_grid):
    """Decode one batch element (all anchors at once).

    coor_ref : VMEM (2, G*G)      f32  row 0 = cell column (x), row 1 = cell row (y)
    pred_ref : VMEM (A, 5+C, G*G) f32  raw network outputs, attributes on sublanes
    out_ref  : VMEM (A, 5+C, G*G) f32  decoded output, lane-dense
    """
    r = jnp.float32(ratio)
    coor = coor_ref[...]                      # (2, GG)
    A = out_ref.shape[0]

    # A is a small compile-time constant (3): the loop fully unrolls and the
    # per-anchor sizes become scalar splat constants.
    for a in range(A):
        # x, y rows: sigmoid + grid-cell offset, scaled back to image pixels.
        out_ref[a, 0:2, :] = (jax.nn.sigmoid(pred_ref[a, 0:2, :]) + coor) * r

        # w, h rows: clamped exp * anchor (anchor/ratio folded with the final
        # *ratio at trace time -> a single scalar multiply per row).
        aw = jnp.float32(anchors_grid[a][0] * ratio)
        ah = jnp.float32(anchors_grid[a][1] * ratio)
        out_ref[a, 2:3, :] = jnp.minimum(jnp.exp(pred_ref[a, 2:3, :]), 1000.0) * aw
        out_ref[a, 3:4, :] = jnp.minimum(jnp.exp(pred_ref[a, 3:4, :]), 1000.0) * ah

    # Objectness: sigmoid only (all anchors at once, not scaled by ratio).
    out_ref[:, 4:5, :] = jax.nn.sigmoid(pred_ref[:, 4:5, :])

    # Class logits: raw pass-through (matches the PyTorch module).
    out_ref[:, 5:, :] = pred_ref[:, 5:, :]


@functools.partial(jax.jit, static_argnames=("anchors", "num_classes", "img_size"))
def yolo_head_forward(X, anchors, num_classes, img_size):
    """Inference forward of yoloHeadv3.

    X       : (B, A*(5+C), G, G) float32 (NCHW, like the PyTorch module)
    anchors : tuple of (aw, ah) in image pixels (static)
    returns : (B, A*G*G, 5+C) float32
    """
    B = X.shape[0]
    G = X.shape[2]
    A = len(anchors)
    C5 = num_classes + 5
    assert X.shape[1] == A * C5 and X.shape[3] == G
    GG = G * G
    ratio = float(img_size) / float(G)

    # Anchors in grid units (scale_anchors in the PyTorch code) -- plain Python
    # floats, baked into the kernel as constants.
    anchors_grid = tuple((float(aw) / ratio, float(ah) / ratio) for aw, ah in anchors)

    # Pure reshape of the NCHW input -- no transpose, no extra HBM pass.
    predict = X.reshape(B, A, C5, GG)

    # Precomputed grid-cell coordinates: avoids integer div/mod in-kernel
    # (expensive for non-power-of-two grids such as 13/26/52).
    cx = jnp.tile(jnp.arange(G, dtype=jnp.float32), G)      # column index, (GG,)
    cy = jnp.repeat(jnp.arange(G, dtype=jnp.float32), G)    # row index,    (GG,)
    coor = jnp.stack([cx, cy], axis=0)                       # (2, GG)

    kernel = functools.partial(yolo_head_kernel, ratio=ratio, anchors_grid=anchors_grid)

    dense = pl.pallas_call(
        kernel,
        out_shape=jax.ShapeDtypeStruct((B, A, C5, GG), jnp.float32),
        grid=(B,),
        in_specs=[
            pl.BlockSpec((2, GG), lambda b: (0, 0)),                     # grid coords
            pl.BlockSpec((None, A, C5, GG), lambda b: (b, 0, 0, 0)),     # predictions
        ],
        out_specs=pl.BlockSpec((None, A, C5, GG), lambda b: (b, 0, 0, 0)),
        compiler_params=pltpu.CompilerParams(
            dimension_semantics=("parallel",)),
    )(coor, predict)

    # Single layout permute to the module's (B, A*G*G, 5+C) contract, done by
    # XLA on the decoded tensor (the kernel itself stays fully lane-dense).
    return jnp.transpose(dense, (0, 1, 3, 2)).reshape(B, A * GG, C5)


def reference_forward(X, anchors, num_classes, img_size):
    """Pure-JAX transcription of the PyTorch inference branch."""
    B = X.shape[0]
    G = X.shape[2]
    A = len(anchors)
    C5 = num_classes + 5
    ratio = img_size / G
    scale_anchors = jnp.asarray(anchors, dtype=jnp.float32) / ratio

    pred = X.reshape(B, A, C5, G, G).transpose(0, 1, 3, 4, 2)   # (B,A,G,G,C5)
    sx = jax.nn.sigmoid(pred[..., 0])
    sy = jax.nn.sigmoid(pred[..., 1])
    w = pred[..., 2]
    h = pred[..., 3]
    conf = jax.nn.sigmoid(pred[..., 4])
    cls = pred[..., 5:]

    coor_x = jnp.tile(jnp.arange(G), (G, 1)).reshape(1, 1, G, G).astype(jnp.float32)
    coor_y = jnp.tile(jnp.arange(G), (G, 1)).T.reshape(1, 1, G, G).astype(jnp.float32)
    ax = scale_anchors[:, 0].reshape(1, A, 1, 1)
    ay = scale_anchors[:, 1].reshape(1, A, 1, 1)

    bx = sx + coor_x
    by = sy + coor_y
    bw = jnp.minimum(jnp.exp(w), 1000.0) * ax
    bh = jnp.minimum(jnp.exp(h), 1000.0) * ay
    boxes = jnp.stack([bx, by, bw, bh], axis=-1)                 # (B,A,G,G,4)

    return jnp.concatenate(
        [boxes.reshape(B, -1, 4) * ratio,
         conf.reshape(B, -1, 1),
         cls.reshape(B, -1, num_classes)], axis=-1)


if __name__ == "__main__":
    # Small, deterministic config (no learned parameters in this module --
    # anchors / num_classes / img_size are constructor constants).
    B = 2
    num_classes = 4
    G = 16
    img_size = 64                      # ratio = 4
    anchors = ((10.0, 13.0), (16.0, 30.0), (33.0, 23.0))
    A = len(anchors)
    C5 = num_classes + 5               # 9

    key = jax.random.PRNGKey(0)
    X = jax.random.normal(key, (B, A * C5, G, G), dtype=jnp.float32)

    out = yolo_head_forward(X, anchors, num_classes, img_size)
    out = jax.block_until_ready(out)

    ref = reference_forward(X, anchors, num_classes, img_size)
    assert out.shape == (B, A * G * G, C5), out.shape
    np.testing.assert_allclose(np.asarray(out), np.asarray(ref), rtol=1e-5, atol=1e-5)

    print("KERNEL_OK")
</pallas_src>

<mosaic_0001>
module attributes {stable_mosaic.version = 11 : i64} {
  func.func @yolo_head_kernel(%arg0: i32, %arg1: memref<2x256xf32, #tpu.memory_space<vmem>>, %arg2: memref<1x3x9x256xf32, #tpu.memory_space<vmem>>, %arg3: memref<1x3x9x256xf32, #tpu.memory_space<vmem>>) attributes {dimension_semantics = [#tpu.dimension_semantics<parallel>], iteration_bounds = array<i64: 2>, scalar_prefetch = 0 : i64, scratch_operands = 0 : i64, tpu.core_type = #tpu.core_type<tc>, window_params = [{pipeline_mode = #tpu.pipeline_mode<synchronous>, transform_indices = @transform_0, window_bounds = array<i64: 2, 256>}, {transform_indices = @transform_1, window_bounds = array<i64: 1, 3, 9, 256>}, {transform_indices = @transform_2, window_bounds = array<i64: 1, 3, 9, 256>}]} {
    %c0 = arith.constant 0 : index
    %c0_0 = arith.constant 0 : index
    %0 = vector.load %arg1[%c0, %c0_0] : memref<2x256xf32, #tpu.memory_space<vmem>>, vector<2x256xf32>
    %c0_1 = arith.constant 0 : index
    %c0_2 = arith.constant 0 : index
    %c0_3 = arith.constant 0 : index
    %c0_4 = arith.constant 0 : index
    %1 = vector.load %arg2[%c0_1, %c0_2, %c0_3, %c0_4] : memref<1x3x9x256xf32, #tpu.memory_space<vmem>>, vector<1x1x2x256xf32>
    %2 = vector.shape_cast %1 : vector<1x1x2x256xf32> to vector<2x256xf32>
    %3 = arith.negf %2 : vector<2x256xf32>
    %4 = math.exp %3 : vector<2x256xf32>
    %cst = arith.constant 1.000000e+00 : f32
    %5 = vector.broadcast %cst : f32 to vector<2x256xf32>
    %6 = arith.addf %5, %4 : vector<2x256xf32>
    %7 = arith.divf %5, %6 : vector<2x256xf32>
    %8 = arith.addf %7, %0 : vector<2x256xf32>
    %cst_5 = arith.constant 4.000000e+00 : f32
    %9 = vector.broadcast %cst_5 : f32 to vector<2x256xf32>
    %10 = arith.mulf %8, %9 : vector<2x256xf32>
    %c0_6 = arith.constant 0 : index
    %c0_7 = arith.constant 0 : index
    %c0_8 = arith.constant 0 : index
    %c0_9 = arith.constant 0 : index
    %11 = vector.load %arg3[%c0_6, %c0_7, %c0_8, %c0_9] : memref<1x3x9x256xf32, #tpu.memory_space<vmem>>, vector<1x1x2x256xf32>
    %12 = vector.shape_cast %11 : vector<1x1x2x256xf32> to vector<2x256xf32>
    %13 = vector.shape_cast %10 : vector<2x256xf32> to vector<1x1x2x256xf32>
    tpu.vector_store %arg3[%c0_6, %c0_7, %c0_8, %c0_9], %13 {strides = array<i32>} : memref<1x3x9x256xf32, #tpu.memory_space<vmem>>, vector<1x1x2x256xf32>,
    %c0_10 = arith.constant 0 : index
    %c0_11 = arith.constant 0 : index
    %c2 = arith.constant 2 : index
    %c0_12 = arith.constant 0 : index
    %14 = vector.load %arg2[%c0_10, %c0_11, %c2, %c0_12] : memref<1x3x9x256xf32, #tpu.memory_space<vmem>>, vector<1x1x1x256xf32>
    %15 = vector.shape_cast %14 : vector<1x1x1x256xf32> to vector<1x256xf32>
    %16 = math.exp %15 : vector<1x256xf32>
    %cst_13 = arith.constant 1.000000e+03 : f32
    %17 = vector.broadcast %cst_13 : f32 to vector<1x256xf32>
    %18 = arith.minimumf %16, %17 : vector<1x256xf32>
    %cst_14 = arith.constant 1.000000e+01 : f32
    %19 = vector.broadcast %cst_14 : f32 to vector<1x256xf32>
    %20 = arith.mulf %18, %19 : vector<1x256xf32>
    %c0_15 = arith.constant 0 : index
    %c0_16 = arith.constant 0 : index
    %c2_17 = arith.constant 2 : index
    %c0_18 = arith.constant 0 : index
    %21 = vector.load %arg3[%c0_15, %c0_16, %c2_17, %c0_18] : memref<1x3x9x256xf32, #tpu.memory_space<vmem>>, vector<1x1x1x256xf32>
    %22 = vector.shape_cast %21 : vector<1x1x1x256xf32> to vector<1x256xf32>
    %23 = vector.shape_cast %20 : vector<1x256xf32> to vector<1x1x1x256xf32>
    tpu.vector_store %arg3[%c0_15, %c0_16, %c2_17, %c0_18], %23 {strides = array<i32>} : memref<1x3x9x256xf32, #tpu.memory_space<vmem>>, vector<1x1x1x256xf32>,
    %c0_19 = arith.constant 0 : index
    %c0_20 = arith.constant 0 : index
    %c3 = arith.constant 3 : index
    %c0_21 = arith.constant 0 : index
    %24 = vector.load %arg2[%c0_19, %c0_20, %c3, %c0_21] : memref<1x3x9x256xf32, #tpu.memory_space<vmem>>, vector<1x1x1x256xf32>
    %25 = vector.shape_cast %24 : vector<1x1x1x256xf32> to vector<1x256xf32>
    %26 = math.exp %25 : vector<1x256xf32>
    %cst_22 = arith.constant 1.000000e+03 : f32
    %27 = vector.broadcast %cst_22 : f32 to vector<1x256xf32>
    %28 = arith.minimumf %26, %27 : vector<1x256xf32>
    %cst_23 = arith.constant 1.300000e+01 : f32
    %29 = vector.broadcast %cst_23 : f32 to vector<1x256xf32>
    %30 = arith.mulf %28, %29 : vector<1x256xf32>
    %c0_24 = arith.constant 0 : index
    %c0_25 = arith.constant 0 : index
    %c3_26 = arith.constant 3 : index
    %c0_27 = arith.constant 0 : index
    %31 = vector.load %arg3[%c0_24, %c0_25, %c3_26, %c0_27] : memref<1x3x9x256xf32, #tpu.memory_space<vmem>>, vector<1x1x1x256xf32>
    %32 = vector.shape_cast %31 : vector<1x1x1x256xf32> to vector<1x256xf32>
    %33 = vector.shape_cast %30 : vector<1x256xf32> to vector<1x1x1x256xf32>
    tpu.vector_store %arg3[%c0_24, %c0_25, %c3_26, %c0_27], %33 {strides = array<i32>} : memref<1x3x9x256xf32, #tpu.memory_space<vmem>>, vector<1x1x1x256xf32>,
    %c0_28 = arith.constant 0 : index
    %c1 = arith.constant 1 : index
    %c0_29 = arith.constant 0 : index
    %c0_30 = arith.constant 0 : index
    %34 = vector.load %arg2[%c0_28, %c1, %c0_29, %c0_30] : memref<1x3x9x256xf32, #tpu.memory_space<vmem>>, vector<1x1x2x256xf32>
    %35 = vector.shape_cast %34 : vector<1x1x2x256xf32> to vector<2x256xf32>
    %36 = arith.negf %35 : vector<2x256xf32>
    %37 = math.exp %36 : vector<2x256xf32>
    %cst_31 = arith.constant 1.000000e+00 : f32
    %38 = vector.broadcast %cst_31 : f32 to vector<2x256xf32>
    %39 = arith.addf %38, %37 : vector<2x256xf32>
    %40 = arith.divf %38, %39 : vector<2x256xf32>
    %41 = arith.addf %40, %0 : vector<2x256xf32>
    %cst_32 = arith.constant 4.000000e+00 : f32
    %42 = vector.broadcast %cst_32 : f32 to vector<2x256xf32>
    %43 = arith.mulf %41, %42 : vector<2x256xf32>
    %c0_33 = arith.constant 0 : index
    %c1_34 = arith.constant 1 : index
    %c0_35 = arith.constant 0 : index
    %c0_36 = arith.constant 0 : index
    %44 = vector.load %arg3[%c0_33, %c1_34, %c0_35, %c0_36] : memref<1x3x9x256xf32, #tpu.memory_space<vmem>>, vector<1x1x2x256xf32>
    %45 = vector.shape_cast %44 : vector<1x1x2x256xf32> to vector<2x256xf32>
    %46 = vector.shape_cast %43 : vector<2x256xf32> to vector<1x1x2x256xf32>
    tpu.vector_store %arg3[%c0_33, %c1_34, %c0_35, %c0_36], %46 {strides = array<i32>} : memref<1x3x9x256xf32, #tpu.memory_space<vmem>>, vector<1x1x2x256xf32>,
    %c0_37 = arith.constant 0 : index
    %c1_38 = arith.constant 1 : index
    %c2_39 = arith.constant 2 : index
    %c0_40 = arith.constant 0 : index
    %47 = vector.load %arg2[%c0_37, %c1_38, %c2_39, %c0_40] : memref<1x3x9x256xf32, #tpu.memory_space<vmem>>, vector<1x1x1x256xf32>
    %48 = vector.shape_cast %47 : vector<1x1x1x256xf32> to vector<1x256xf32>
    %49 = math.exp %48 : vector<1x256xf32>
    %cst_41 = arith.constant 1.000000e+03 : f32
    %50 = vector.broadcast %cst_41 : f32 to vector<1x256xf32>
    %51 = arith.minimumf %49, %50 : vector<1x256xf32>
    %cst_42 = arith.constant 1.600000e+01 : f32
    %52 = vector.broadcast %cst_42 : f32 to vector<1x256xf32>
    %53 = arith.mulf %51, %52 : vector<1x256xf32>
    %c0_43 = arith.constant 0 : index
    %c1_44 = arith.constant 1 : index
    %c2_45 = arith.constant 2 : index
    %c0_46 = arith.constant 0 : index
    %54 = vector.load %arg3[%c0_43, %c1_44, %c2_45, %c0_46] : memref<1x3x9x256xf32, #tpu.memory_space<vmem>>, vector<1x1x1x256xf32>
    %55 = vector.shape_cast %54 : vector<1x1x1x256xf32> to vector<1x256xf32>
    %56 = vector.shape_cast %53 : vector<1x256xf32> to vector<1x1x1x256xf32>
    tpu.vector_store %arg3[%c0_43, %c1_44, %c2_45, %c0_46], %56 {strides = array<i32>} : memref<1x3x9x256xf32, #tpu.memory_space<vmem>>, vector<1x1x1x256xf32>,
    %c0_47 = arith.constant 0 : index
    %c1_48 = arith.constant 1 : index
    %c3_49 = arith.constant 3 : index
    %c0_50 = arith.constant 0 : index
    %57 = vector.load %arg2[%c0_47, %c1_48, %c3_49, %c0_50] : memref<1x3x9x256xf32, #tpu.memory_space<vmem>>, vector<1x1x1x256xf32>
    %58 = vector.shape_cast %57 : vector<1x1x1x256xf32> to vector<1x256xf32>
    %59 = math.exp %58 : vector<1x256xf32>
    %cst_51 = arith.constant 1.000000e+03 : f32
    %60 = vector.broadcast %cst_51 : f32 to vector<1x256xf32>
    %61 = arith.minimumf %59, %60 : vector<1x256xf32>
    %cst_52 = arith.constant 3.000000e+01 : f32
    %62 = vector.broadcast %cst_52 : f32 to vector<1x256xf32>
    %63 = arith.mulf %61, %62 : vector<1x256xf32>
    %c0_53 = arith.constant 0 : index
    %c1_54 = arith.constant 1 : index
    %c3_55 = arith.constant 3 : index
    %c0_56 = arith.constant 0 : index
    %64 = vector.load %arg3[%c0_53, %c1_54, %c3_55, %c0_56] : memref<1x3x9x256xf32, #tpu.memory_space<vmem>>, vector<1x1x1x256xf32>
    %65 = vector.shape_cast %64 : vector<1x1x1x256xf32> to vector<1x256xf32>
    %66 = vector.shape_cast %63 : vector<1x256xf32> to vector<1x1x1x256xf32>
    tpu.vector_store %arg3[%c0_53, %c1_54, %c3_55, %c0_56], %66 {strides = array<i32>} : memref<1x3x9x256xf32, #tpu.memory_space<vmem>>, vector<1x1x1x256xf32>,
    %c0_57 = arith.constant 0 : index
    %c2_58 = arith.constant 2 : index
    %c0_59 = arith.constant 0 : index
    %c0_60 = arith.constant 0 : index
    %67 = vector.load %arg2[%c0_57, %c2_58, %c0_59, %c0_60] : memref<1x3x9x256xf32, #tpu.memory_space<vmem>>, vector<1x1x2x256xf32>
    %68 = vector.shape_cast %67 : vector<1x1x2x256xf32> to vector<2x256xf32>
    %69 = arith.negf %68 : vector<2x256xf32>
    %70 = math.exp %69 : vector<2x256xf32>
    %cst_61 = arith.constant 1.000000e+00 : f32
    %71 = vector.broadcast %cst_61 : f32 to vector<2x256xf32>
    %72 = arith.addf %71, %70 : vector<2x256xf32>
    %73 = arith.divf %71, %72 : vector<2x256xf32>
    %74 = arith.addf %73, %0 : vector<2x256xf32>
    %cst_62 = arith.constant 4.000000e+00 : f32
    %75 = vector.broadcast %cst_62 : f32 to vector<2x256xf32>
    %76 = arith.mulf %74, %75 : vector<2x256xf32>
    %c0_63 = arith.constant 0 : index
    %c2_64 = arith.constant 2 : index
    %c0_65 = arith.constant 0 : index
    %c0_66 = arith.constant 0 : index
    %77 = vector.load %arg3[%c0_63, %c2_64, %c0_65, %c0_66] : memref<1x3x9x256xf32, #tpu.memory_space<vmem>>, vector<1x1x2x256xf32>
    %78 = vector.shape_cast %77 : vector<1x1x2x256xf32> to vector<2x256xf32>
    %79 = vector.shape_cast %76 : vector<2x256xf32> to vector<1x1x2x256xf32>
    tpu.vector_store %arg3[%c0_63, %c2_64, %c0_65, %c0_66], %79 {strides = array<i32>} : memref<1x3x9x256xf32, #tpu.memory_space<vmem>>, vector<1x1x2x256xf32>,
    %c0_67 = arith.constant 0 : index
    %c2_68 = arith.constant 2 : index
    %c2_69 = arith.constant 2 : index
    %c0_70 = arith.constant 0 : index
    %80 = vector.load %arg2[%c0_67, %c2_68, %c2_69, %c0_70] : memref<1x3x9x256xf32, #tpu.memory_space<vmem>>, vector<1x1x1x256xf32>
    %81 = vector.shape_cast %80 : vector<1x1x1x256xf32> to vector<1x256xf32>
    %82 = math.exp %81 : vector<1x256xf32>
    %cst_71 = arith.constant 1.000000e+03 : f32
    %83 = vector.broadcast %cst_71 : f32 to vector<1x256xf32>
    %84 = arith.minimumf %82, %83 : vector<1x256xf32>
    %cst_72 = arith.constant 3.300000e+01 : f32
    %85 = vector.broadcast %cst_72 : f32 to vector<1x256xf32>
    %86 = arith.mulf %84, %85 : vector<1x256xf32>
    %c0_73 = arith.constant 0 : index
    %c2_74 = arith.constant 2 : index
    %c2_75 = arith.constant 2 : index
    %c0_76 = arith.constant 0 : index
    %87 = vector.load %arg3[%c0_73, %c2_74, %c2_75, %c0_76] : memref<1x3x9x256xf32, #tpu.memory_space<vmem>>, vector<1x1x1x256xf32>
    %88 = vector.shape_cast %87 : vector<1x1x1x256xf32> to vector<1x256xf32>
    %89 = vector.shape_cast %86 : vector<1x256xf32> to vector<1x1x1x256xf32>
    tpu.vector_store %arg3[%c0_73, %c2_74, %c2_75, %c0_76], %89 {strides = array<i32>} : memref<1x3x9x256xf32, #tpu.memory_space<vmem>>, vector<1x1x1x256xf32>,
    %c0_77 = arith.constant 0 : index
    %c2_78 = arith.constant 2 : index
    %c3_79 = arith.constant 3 : index
    %c0_80 = arith.constant 0 : index
    %90 = vector.load %arg2[%c0_77, %c2_78, %c3_79, %c0_80] : memref<1x3x9x256xf32, #tpu.memory_space<vmem>>, vector<1x1x1x256xf32>
    %91 = vector.shape_cast %90 : vector<1x1x1x256xf32> to vector<1x256xf32>
    %92 = math.exp %91 : vector<1x256xf32>
    %cst_81 = arith.constant 1.000000e+03 : f32
    %93 = vector.broadcast %cst_81 : f32 to vector<1x256xf32>
    %94 = arith.minimumf %92, %93 : vector<1x256xf32>
    %cst_82 = arith.constant 2.300000e+01 : f32
    %95 = vector.broadcast %cst_82 : f32 to vector<1x256xf32>
    %96 = arith.mulf %94, %95 : vector<1x256xf32>
    %c0_83 = arith.constant 0 : index
    %c2_84 = arith.constant 2 : index
    %c3_85 = arith.constant 3 : index
    %c0_86 = arith.constant 0 : index
    %97 = vector.load %arg3[%c0_83, %c2_84, %c3_85, %c0_86] : memref<1x3x9x256xf32, #tpu.memory_space<vmem>>, vector<1x1x1x256xf32>
    %98 = vector.shape_cast %97 : vector<1x1x1x256xf32> to vector<1x256xf32>
    %99 = vector.shape_cast %96 : vector<1x256xf32> to vector<1x1x1x256xf32>
    tpu.vector_store %arg3[%c0_83, %c2_84, %c3_85, %c0_86], %99 {strides = array<i32>} : memref<1x3x9x256xf32, #tpu.memory_space<vmem>>, vector<1x1x1x256xf32>,
    %c0_87 = arith.constant 0 : index
    %c0_88 = arith.constant 0 : index
    %c4 = arith.constant 4 : index
    %c0_89 = arith.constant 0 : index
    %100 = vector.load %arg2[%c0_87, %c0_88, %c4, %c0_89] : memref<1x3x9x256xf32, #tpu.memory_space<vmem>>, vector<1x3x1x256xf32>
    %101 = vector.shape_cast %100 : vector<1x3x1x256xf32> to vector<3x1x256xf32>
    %102 = arith.negf %101 : vector<3x1x256xf32>
    %103 = math.exp %102 : vector<3x1x256xf32>
    %cst_90 = arith.constant 1.000000e+00 : f32
    %104 = vector.broadcast %cst_90 : f32 to vector<3x1x256xf32>
    %105 = arith.addf %104, %103 : vector<3x1x256xf32>
    %106 = arith.divf %104, %105 : vector<3x1x256xf32>
    %c0_91 = arith.constant 0 : index
    %c0_92 = arith.constant 0 : index
    %c4_93 = arith.constant 4 : index
    %c0_94 = arith.constant 0 : index
    %107 = vector.load %arg3[%c0_91, %c0_92, %c4_93, %c0_94] : memref<1x3x9x256xf32, #tpu.memory_space<vmem>>, vector<1x3x1x256xf32>
    %108 = vector.shape_cast %107 : vector<1x3x1x256xf32> to vector<3x1x256xf32>
    %109 = vector.shape_cast %106 : vector<3x1x256xf32> to vector<1x3x1x256xf32>
    tpu.vector_store %arg3[%c0_91, %c0_92, %c4_93, %c0_94], %109 {strides = array<i32>} : memref<1x3x9x256xf32, #tpu.memory_space<vmem>>, vector<1x3x1x256xf32>,
    %c0_95 = arith.constant 0 : index
    %c0_96 = arith.constant 0 : index
    %c5 = arith.constant 5 : index
    %c0_97 = arith.constant 0 : index
    %110 = vector.load %arg2[%c0_95, %c0_96, %c5, %c0_97] : memref<1x3x9x256xf32, #tpu.memory_space<vmem>>, vector<1x3x4x256xf32>
    %111 = vector.shape_cast %110 : vector<1x3x4x256xf32> to vector<3x4x256xf32>
    %c0_98 = arith.constant 0 : index
    %c0_99 = arith.constant 0 : index
    %c5_100 = arith.constant 5 : index
    %c0_101 = arith.constant 0 : index
    %112 = vector.load %arg3[%c0_98, %c0_99, %c5_100, %c0_101] : memref<1x3x9x256xf32, #tpu.memory_space<vmem>>, vector<1x3x4x256xf32>
    %113 = vector.shape_cast %112 : vector<1x3x4x256xf32> to vector<3x4x256xf32>
    %114 = vector.shape_cast %111 : vector<3x4x256xf32> to vector<1x3x4x256xf32>
    tpu.vector_store %arg3[%c0_98, %c0_99, %c5_100, %c0_101], %114 {strides = array<i32>} : memref<1x3x9x256xf32, #tpu.memory_space<vmem>>, vector<1x3x4x256xf32>,
    return
  }
  func.func @transform_0(%arg0: i32) -> (i32, i32) {
    %c0_i32 = arith.constant 0 : i32
    %c0_i32_0 = arith.constant 0 : i32
    %c0_i32_1 = arith.constant 0 : i32
    return %c0_i32, %c0_i32_0 : i32, i32
  }
  func.func @transform_1(%arg0: i32) -> (i32, i32, i32, i32) {
    %c0_i32 = arith.constant 0 : i32
    %c0_i32_0 = arith.constant 0 : i32
    %c0_i32_1 = arith.constant 0 : i32
    %c0_i32_2 = arith.constant 0 : i32
    return %arg0, %c0_i32, %c0_i32_0, %c0_i32_1 : i32, i32, i32, i32
  }
  func.func @transform_2(%arg0: i32) -> (i32, i32, i32, i32) {
    %c0_i32 = arith.constant 0 : i32
    %c0_i32_0 = arith.constant 0 : i32
    %c0_i32_1 = arith.constant 0 : i32
    %c0_i32_2 = arith.constant 0 : i32
    return %arg0, %c0_i32, %c0_i32_0, %c0_i32_1 : i32, i32, i32, i32
  }
}

</mosaic_0001>

<llo_original>
// kernel: yolo_head_forward.1
$region0: #{yolo_head_forward.1}
  #allocation0 [shape = 'u32[]', space=smem, size = 0x4, offset = 0x4, fixed_abs, tag = 'smem constant byte address 0x4 - core index']
  #allocation1 [shape = 'u32[72,128]{1,0:T(1,128)}', space=vmem, size = 0x9000, scoped, tag = 'internal scratch']
  %s0 = inlined_call_operand.vmem [shape: f32[2,256], index: 0, kind: input, shape index: {}]
  %s1 = inlined_call_operand.vmem [shape: f32[2,3,9,256], index: 1, kind: input, shape index: {}]
  %s2 = inlined_call_operand.vmem [shape: f32[2,3,9,256], index: 2, kind: output, shape index: {}]
  %s3 = sld [smem:[#allocation0]]
  $region41: #{yolo_head_forward.1} parent=0
    _
  %s5 = ssub.s32 1, %s3
  %s6 = scalar_select 0, %s5, %s3
  loop: start=0, step=1, limit=4
  $region2: #{yolo_head_forward.1} parent=0 // loop_pre_header
    _
  $region3: #{yolo_head_forward.1} parent=0 // loop_header
    %s8 = sphi 0, %s12
    %p9 = scmp.ge.s32.totalorder %s8, 4
    %s16 = sphi 0, %s16
    %s18 = sphi 0, %s16
    %s19 = sphi 0, %s18
    %s33 = sphi 0, %s19
    %s39 = sphi 0, %s41
    %s42 = sphi 0, %s39
    %s43 = sphi 0, %s42
    %s59 = sphi 0, %s43
    %s65 = sphi 0, %s67
    %s68 = sphi 0, %s65
    %s69 = sphi 0, %s68
    %s85 = sphi 0, %s69
  $region4: #{yolo_head_forward.1} parent=0 // loop_header_branch
    %11 = sbr.rel (%p9) target = $region8
  $region5: #{yolo_head_forward.1} parent=0 // loop_body
    %s13 = ssub.s32 %s8, 1
    %s14 = ssub.s32 %s8, 2
    %s15 = sadd.s32 %s8, 1
    %s17 = sadd.s32 %s16, 1
    %p20 = scmp.eq.s32.totalorder %s8, 1
    %p21 = scmp.ne.s32.totalorder %s16, %s18
    %p22 = scmp.eq.s32.totalorder %s8, 0
    %p23 = por %p21, %p22
    %p24 = scmp.ne.s32.totalorder %s16, %s18
    %p25 = scmp.eq.s32.totalorder %s13, 1
    %p26 = por %p24, %p25
    %p27 = scmp.ne.s32.totalorder %s18, %s19
    %p28 = scmp.eq.s32.totalorder %s13, 0
    %p29 = por %p27, %p28
    %p30 = scmp.ne.s32.totalorder %s18, %s19
    %p31 = scmp.eq.s32.totalorder %s14, 1
    %p32 = por %p30, %p31
    %p34 = scmp.ne.s32.totalorder %s19, %s33
    %p35 = scmp.eq.s32.totalorder %s14, 0
    %p36 = por %p34, %p35
    %s37 = ssub.s32 %s8, %s15
    %p38 = scmp.eq.s32.totalorder %s37, 0
    %s40 = sadd.s32 %s39, 1
    %s41 = scalar_select %p38, %s39, %s40
    %p44 = pneg %p38
    %p45 = scmp.eq.s32.totalorder %s8, 1
    %p46 = por %p44, %p45
    %p47 = scmp.ne.s32.totalorder %s39, %s42
    %p48 = scmp.eq.s32.totalorder %s8, 0
    %p49 = por %p47, %p48
    %p50 = scmp.ne.s32.totalorder %s39, %s42
    %p51 = scmp.eq.s32.totalorder %s13, 1
    %p52 = por %p50, %p51
    %p53 = scmp.ne.s32.totalorder %s42, %s43
    %p54 = scmp.eq.s32.totalorder %s13, 0
    %p55 = por %p53, %p54
    %p56 = scmp.ne.s32.totalorder %s42, %s43
    %p57 = scmp.eq.s32.totalorder %s14, 1
    %p58 = por %p56, %p57
    %p60 = scmp.ne.s32.totalorder %s43, %s59
    %p61 = scmp.eq.s32.totalorder %s14, 0
    %p62 = por %p60, %p61
    %s63 = ssub.s32 %s8, %s15
    %p64 = scmp.eq.s32.totalorder %s63, 0
    %s66 = sadd.s32 %s65, 1
    %s67 = scalar_select %p64, %s65, %s66
    %p70 = pneg %p64
    %p71 = scmp.eq.s32.totalorder %s8, 1
    %p72 = por %p70, %p71
    %p73 = scmp.ne.s32.totalorder %s65, %s68
    %p74 = scmp.eq.s32.totalorder %s8, 0
    %p75 = por %p73, %p74
    %p76 = scmp.ne.s32.totalorder %s65, %s68
    %p77 = scmp.eq.s32.totalorder %s13, 1
    %p78 = por %p76, %p77
    %p79 = scmp.ne.s32.totalorder %s68, %s69
    %p80 = scmp.eq.s32.totalorder %s13, 0
    %p81 = por %p79, %p80
    %p82 = scmp.ne.s32.totalorder %s68, %s69
    %p83 = scmp.eq.s32.totalorder %s14, 1
    %p84 = por %p82, %p83
    %p86 = scmp.ne.s32.totalorder %s69, %s85
    %p87 = scmp.eq.s32.totalorder %s14, 0
    %p88 = por %p86, %p87
    %p89 = scmp.le.s32.totalorder 1, %s8
    %p90 = scmp.lt.s32.totalorder %s8, 3
    %p91 = pnand %p89, %p90
    %p92 = pneg %p91
    // Predicated region
    $region9: #{yolo_head_forward.1} parent=5 // pred_check
      _
    $region10: #{yolo_head_forward.1} parent=5 // pred_check_branch
      %94 = sbr.rel (%p91) target = $region12
    $region11: #{yolo_head_forward.1} parent=5 // pred_region
      %s95 = ssub.s32 %s8, 1
      // Predicated region
      $region13: #{yolo_head_forward.1} parent=11 // pred_check
        %p96 = pneg %p29
      $region14: #{yolo_head_forward.1} parent=11 // pred_check_branch
        %98 = sbr.rel (%p96) target = $region16
      $region15: #{yolo_head_forward.1} parent=11 // pred_region
        _
      $region16: #{yolo_head_forward.1} parent=11 // pred_fallthru
        _
    $region12: #{yolo_head_forward.1} parent=5 // pred_fallthru
      _
    %p99 = scmp.lt.s32.totalorder %s8, 2
    // Predicated region
    $region17: #{yolo_head_forward.1} parent=5 // pred_check
      %p100 = pneg %p99
    $region18: #{yolo_head_forward.1} parent=5 // pred_check_branch
      %102 = sbr.rel (%p100) target = $region20
    $region19: #{yolo_head_forward.1} parent=5 // pred_region
      // Predicated region
      $region21: #{yolo_head_forward.1} parent=19 // pred_check
        %p103 = pneg %p49
      $region22: #{yolo_head_forward.1} parent=19 // pred_check_branch
        %105 = sbr.rel (%p103) target = $region24
      $region23: #{yolo_head_forward.1} parent=19 // pred_region
        %p106 = scmp.lt.s32.totalorder %s8, 1
        %s107 = scalar_select %p106, %s8, 1
        %s108 = smul.addr %s107, 12
        %s109 = smul.addr %s108, 8
        %s110 = scalar_lea.vmem %s1, %s109
      $region24: #{yolo_head_forward.1} parent=19 // pred_fallthru
        _
    $region20: #{yolo_head_forward.1} parent=5 // pred_fallthru
      _
    %p111 = scmp.le.s32.totalorder 1, %s8
    %p112 = scmp.lt.s32.totalorder %s8, 3
    %p113 = pnand %p111, %p112
    %p114 = pneg %p113
    // Predicated region
    $region25: #{yolo_head_forward.1} parent=5 // pred_check
      _
    $region26: #{yolo_head_forward.1} parent=5 // pred_check_branch
      %116 = sbr.rel (%p113) target = $region28
    $region27: #{yolo_head_forward.1} parent=5 // pred_region
      %s117 = ssub.s32 %s8, 1
      %p118 = pneg %p29
      %p119 = pneg %p26
      %p120 = scmp.lt.s32.totalorder %s13, 1
      %s121 = scalar_select %p120, %s13, 1
      %s122 = smul.addr %s121, 12
      %s123 = smul.addr %s122, 8
      %s124 = scalar_lea.vmem %s1, %s123
      %p125 = pneg %p55
      %p126 = pneg %p52
      %p127 = pneg %p81
      %p128 = pneg %p78
      %p129 = scmp.lt.s32.totalorder %s13, 1
      %s130 = scalar_select %p129, %s13, 1
      %s131 = smul.addr %s130, 12
      %s132 = smul.addr %s131, 8
      %s133 = scalar_lea.vmem %s2, %s132
      %p134 = scmp.lt.s32.totalorder %s13, 1
      %s135 = scalar_select %p134, %s13, 1
      %s136 = smul.addr %s135, 12
      %s137 = smul.addr %s136, 8
      %s138 = scalar_lea.vmem %s1, %s137
      %p139 = scmp.lt.s32.totalorder %s13, 1
      %s140 = scalar_select %p139, %s13, 1
      %s141 = smul.addr %s140, 12
      %s142 = smul.addr %s141, 8
      %s143 = scalar_lea.vmem %s2, %s142
      %v144 = vld [vmem:[%s0] sm:$0xf]
      %v145 = vld [vmem:[%s138] sm:$0x3]
      %v146 = vld [vmem:[%s138 + $0x8] sm:$0x3]
      %v147 = vxor.u32 %v145, 2147483648
      %v148 = vxor.u32 %v146, 2147483648
      %v149 = vmul.f32 %v147, 1.442695
      %v150 = vpow.pop %v149
      %v151 = vmul.f32 %v148, 1.442695
      %v152 = vpow.pop %v151
      %v153 = vadd.f32 %v150, 1.0
      %v154 = vadd.f32 %v152, 1.0
      %v155 = vrcp.pop %v153
      %v156 = vmul.f32 %v153, %v155
      %v157 = vsub.f32 1.0, %v156
      %v158 = vmul.f32 %v155, %v157
      %v159 = vadd.f32 %v155, %v158
      %vm160 = vweird.f32 %v153
      %vm161 = vweird.f32 %v155
      %vm162 = vmor %vm160, %vm161
      %v163 = vsel %vm162, %v155, %v159
      %v164 = vand.u32 2147483647, %v153
      %vm165 = vcmp.eq.f32.partialorder %v164, 8.507059e+37
      %v166 = vand.u32 %v153, 2147483648
      %v167 = vor.u32 1.1754944e-38, %v166
      %v168 = vsel %vm165, %v167, %v163
      %v169 = vmul.f32 1.0, %v168
      %v170 = vrcp.pop %v154
      %v171 = vmul.f32 %v154, %v170
      %v172 = vsub.f32 1.0, %v171
      %v173 = vmul.f32 %v170, %v172
      %v174 = vadd.f32 %v170, %v173
      %vm175 = vweird.f32 %v154
      %vm176 = vweird.f32 %v170
      %vm177 = vmor %vm175, %vm176
      %v178 = vsel %vm177, %v170, %v174
      %v179 = vand.u32 2147483647, %v154
      %vm180 = vcmp.eq.f32.partialorder %v179, 8.507059e+37
      %v181 = vand.u32 %v154, 2147483648
      %v182 = vor.u32 1.1754944e-38, %v181
      %v183 = vsel %vm180, %v182, %v178
      %v184 = vmul.f32 1.0, %v183
      %186 = vst [vmem:[#allocation1] ss:$4 sm:$0xff] %v144
      %v187 = vld.sshfl [vmem:[#allocation1] sm:$0xff pattern:$0x73625140]
      %v188 = vld.sshfl [vmem:[#allocation1 + $0x8] sm:$0xff pattern:$0x73625140]
      %v191 = vadd.f32 %v169, %v187
      %v192 = vadd.f32 %v184, %v188
      %v193 = vmul.f32 %v191, 4.0
      %v194 = vmul.f32 %v192, 4.0
      %195 = vst [vmem:[%s143] sm:$0x3] %v193
      %196 = vst [vmem:[%s143 + $0x8] sm:$0x3] %v194
      %s197 = scalar_lea.vmem %s138, 2
      %v198 = vld [vmem:[%s197] ss:$8 sm:$0x3]
      %v199 = vmul.f32 %v198, 1.442695
      %v200 = vpow.pop %v199
      %v201 = vmin.f32 %v200, 1000.0
      %v202 = vmul.f32 %v201, 10.0
      %v203 = vlaneseq
      %vm204 = vcmp.ge.s32.totalorder %v203, 0
      %vm205 = vcmp.lt.s32.totalorder %v203, 256
      %vm206 = vmand %vm204, %vm205
      %s207 = scalar_lea.vmem %s143, 2
      %208 = vst.msk [vmem:[%s207] ss:$8 sm:$0x3] %vm206, %v202
      %209 = vst.msk [vmem:[%s207] ss:$8 sm:$0x0] %vm206, %v202
      %s210 = scalar_lea.vmem %s138, 3
      %v211 = vld [vmem:[%s210] ss:$8 sm:$0x3]
      %v212 = vmul.f32 %v211, 1.442695
      %v213 = vpow.pop %v212
      %v214 = vmin.f32 %v213, 1000.0
      %v215 = vmul.f32 %v214, 13.0
      %s216 = scalar_lea.vmem %s143, 3
      %217 = vst.msk [vmem:[%s216] ss:$8 sm:$0x3] %vm206, %v215
      %218 = vst.msk [vmem:[%s216] ss:$8 sm:$0x0] %vm206, %v215
      %s219 = scalar_lea.vmem %s138, 32
      %v220 = vld [vmem:[%s219] sm:$0x3]
      %v221 = vld [vmem:[%s219 + $0x8] sm:$0x3]
      %v222 = vxor.u32 %v220, 2147483648
      %v223 = vxor.u32 %v221, 2147483648
      %v224 = vmul.f32 %v222, 1.442695
      %v225 = vpow.pop %v224
      %v226 = vmul.f32 %v223, 1.442695
      %v227 = vpow.pop %v226
      %v228 = vadd.f32 %v225, 1.0
      %v229 = vadd.f32 %v227, 1.0
      %v230 = vrcp.pop %v228
      %v231 = vmul.f32 %v228, %v230
      %v232 = vsub.f32 1.0, %v231
      %v233 = vmul.f32 %v230, %v232
      %v234 = vadd.f32 %v230, %v233
      %vm235 = vweird.f32 %v228
      %vm236 = vweird.f32 %v230
      %vm237 = vmor %vm235, %vm236
      %v238 = vsel %vm237, %v230, %v234
      %v239 = vand.u32 2147483647, %v228
      %vm240 = vcmp.eq.f32.partialorder %v239, 8.507059e+37
      %v241 = vand.u32 %v228, 2147483648
      %v242 = vor.u32 1.1754944e-38, %v241
      %v243 = vsel %vm240, %v242, %v238
      %v244 = vmul.f32 1.0, %v243
      %v245 = vrcp.pop %v229
      %v246 = vmul.f32 %v229, %v245
      %v247 = vsub.f32 1.0, %v246
      %v248 = vmul.f32 %v245, %v247
      %v249 = vadd.f32 %v245, %v248
      %vm250 = vweird.f32 %v229
      %vm251 = vweird.f32 %v245
      %vm252 = vmor %vm250, %vm251
      %v253 = vsel %vm252, %v245, %v249
      %v254 = vand.u32 2147483647, %v229
      %vm255 = vcmp.eq.f32.partialorder %v254, 8.507059e+37
      %v256 = vand.u32 %v229, 2147483648
      %v257 = vor.u32 1.1754944e-38, %v256
      %v258 = vsel %vm255, %v257, %v253
      %v259 = vmul.f32 1.0, %v258
      %260 = vst [vmem:[#allocation1] ss:$4 sm:$0xff] %v144
      %v261 = vld.sshfl [vmem:[#allocation1] sm:$0xff pattern:$0x73625140]
      %v262 = vld.sshfl [vmem:[#allocation1 + $0x8] sm:$0xff pattern:$0x73625140]
      %v265 = vadd.f32 %v244, %v261
      %v266 = vadd.f32 %v259, %v262
      %v267 = vmul.f32 %v265, 4.0
      %v268 = vmul.f32 %v266, 4.0
      %s269 = scalar_lea.vmem %s143, 32
      %270 = vst [vmem:[%s269] sm:$0x3] %v267
      %271 = vst [vmem:[%s269 + $0x8] sm:$0x3] %v268
      %s272 = scalar_lea.vmem %s219, 2
      %v273 = vld [vmem:[%s272] ss:$8 sm:$0x3]
      %v274 = vmul.f32 %v273, 1.442695
      %v275 = vpow.pop %v274
      %v276 = vmin.f32 %v275, 1000.0
      %v277 = vmul.f32 %v276, 16.0
      %s278 = scalar_lea.vmem %s269, 2
      %279 = vst.msk [vmem:[%s278] ss:$8 sm:$0x3] %vm206, %v277
      %280 = vst.msk [vmem:[%s278] ss:$8 sm:$0x0] %vm206, %v277
      %s281 = scalar_lea.vmem %s219, 3
      %v282 = vld [vmem:[%s281] ss:$8 sm:$0x3]
      %v283 = vmul.f32 %v282, 1.442695
      %v284 = vpow.pop %v283
      %v285 = vmin.f32 %v284, 1000.0
      %v286 = vmul.f32 %v285, 30.0
      %s287 = scalar_lea.vmem %s269, 3
      %288 = vst.msk [vmem:[%s287] ss:$8 sm:$0x3] %vm206, %v286
      %289 = vst.msk [vmem:[%s287] ss:$8 sm:$0x0] %vm206, %v286
      %s290 = scalar_lea.vmem %s138, 64
      %v291 = vld [vmem:[%s290] sm:$0x3]
      %v292 = vld [vmem:[%s290 + $0x8] sm:$0x3]
      %v293 = vxor.u32 %v291, 2147483648
      %v294 = vxor.u32 %v292, 2147483648
      %v295 = vmul.f32 %v293, 1.442695
      %v296 = vpow.pop %v295
      %v297 = vmul.f32 %v294, 1.442695
      %v298 = vpow.pop %v297
      %v299 = vadd.f32 %v296, 1.0
      %v300 = vadd.f32 %v298, 1.0
      %v301 = vrcp.pop %v299
      %v302 = vmul.f32 %v299, %v301
      %v303 = vsub.f32 1.0, %v302
      %v304 = vmul.f32 %v301, %v303
      %v305 = vadd.f32 %v301, %v304
      %vm306 = vweird.f32 %v299
      %vm307 = vweird.f32 %v301
      %vm308 = vmor %vm306, %vm307
      %v309 = vsel %vm308, %v301, %v305
      %v310 = vand.u32 2147483647, %v299
      %vm311 = vcmp.eq.f32.partialorder %v310, 8.507059e+37
      %v312 = vand.u32 %v299, 2147483648
      %v313 = vor.u32 1.1754944e-38, %v312
      %v314 = vsel %vm311, %v313, %v309
      %v315 = vmul.f32 1.0, %v314
      %v316 = vrcp.pop %v300
      %v317 = vmul.f32 %v300, %v316
      %v318 = vsub.f32 1.0, %v317
      %v319 = vmul.f32 %v316, %v318
      %v320 = vadd.f32 %v316, %v319
      %vm321 = vweird.f32 %v300
      %vm322 = vweird.f32 %v316
      %vm323 = vmor %vm321, %vm322
      %v324 = vsel %vm323, %v316, %v320
      %v325 = vand.u32 2147483647, %v300
      %vm326 = vcmp.eq.f32.partialorder %v325, 8.507059e+37
      %v327 = vand.u32 %v300, 2147483648
      %v328 = vor.u32 1.1754944e-38, %v327
      %v329 = vsel %vm326, %v328, %v324
      %v330 = vmul.f32 1.0, %v329
      %331 = vst [vmem:[#allocation1] ss:$4 sm:$0xff] %v144
      %v332 = vld.sshfl [vmem:[#allocation1] sm:$0xff pattern:$0x73625140]
      %v333 = vld.sshfl [vmem:[#allocation1 + $0x8] sm:$0xff pattern:$0x73625140]
      %v336 = vadd.f32 %v315, %v332
      %v337 = vadd.f32 %v330, %v333
      %v338 = vmul.f32 %v336, 4.0
      %v339 = vmul.f32 %v337, 4.0
      %s340 = scalar_lea.vmem %s143, 64
      %341 = vst [vmem:[%s340] sm:$0x3] %v338
      %342 = vst [vmem:[%s340 + $0x8] sm:$0x3] %v339
      %s343 = scalar_lea.vmem %s290, 2
      %v344 = vld [vmem:[%s343] ss:$8 sm:$0x3]
      %v345 = vmul.f32 %v344, 1.442695
      %v346 = vpow.pop %v345
      %v347 = vmin.f32 %v346, 1000.0
      %v348 = vmul.f32 %v347, 33.0
      %s349 = scalar_lea.vmem %s340, 2
      %350 = vst.msk [vmem:[%s349] ss:$8 sm:$0x3] %vm206, %v348
      %351 = vst.msk [vmem:[%s349] ss:$8 sm:$0x0] %vm206, %v348
      %s352 = scalar_lea.vmem %s290, 3
      %v353 = vld [vmem:[%s352] ss:$8 sm:$0x3]
      %v354 = vmul.f32 %v353, 1.442695
      %v355 = vpow.pop %v354
      %v356 = vmin.f32 %v355, 1000.0
      %v357 = vmul.f32 %v356, 23.0
      %s358 = scalar_lea.vmem %s340, 3
      %359 = vst.msk [vmem:[%s358] ss:$8 sm:$0x3] %vm206, %v357
      %360 = vst.msk [vmem:[%s358] ss:$8 sm:$0x0] %vm206, %v357
      %s361 = scalar_lea.vmem %s138, 4
      %v362 = vld [vmem:[%s361] ss:$8 sm:$0x3]
      %s363 = scalar_lea.vmem %s138, 36
      %v364 = vld [vmem:[%s363] ss:$8 sm:$0x3]
      %s365 = scalar_lea.vmem %s138, 68
      %v366 = vld [vmem:[%s365] ss:$8 sm:$0x3]
      %v367 = vxor.u32 %v362, 2147483648
      %v368 = vxor.u32 %v364, 2147483648
      %v369 = vxor.u32 %v366, 2147483648
      %v370 = vmul.f32 %v367, 1.442695
      %v371 = vpow.pop %v370
      %v372 = vmul.f32 %v368, 1.442695
      %v373 = vpow.pop %v372
      %v374 = vmul.f32 %v369, 1.442695
      %v375 = vpow.pop %v374
      %v376 = vadd.f32 %v371, 1.0
      %v377 = vadd.f32 %v373, 1.0
      %v378 = vadd.f32 %v375, 1.0
      %v379 = vrcp.pop %v376
      %v380 = vmul.f32 %v376, %v379
      %v381 = vsub.f32 1.0, %v380
      %v382 = vmul.f32 %v379, %v381
      %v383 = vadd.f32 %v379, %v382
      %vm384 = vweird.f32 %v376
      %vm385 = vweird.f32 %v379
      %vm386 = vmor %vm384, %vm385
      %v387 = vsel %vm386, %v379, %v383
      %v388 = vand.u32 2147483647, %v376
      %vm389 = vcmp.eq.f32.partialorder %v388, 8.507059e+37
      %v390 = vand.u32 %v376, 2147483648
      %v391 = vor.u32 1.1754944e-38, %v390
      %v392 = vsel %vm389, %v391, %v387
      %v393 = vmul.f32 1.0, %v392
      %v394 = vrcp.pop %v377
      %v395 = vmul.f32 %v377, %v394
      %v396 = vsub.f32 1.0, %v395
      %v397 = vmul.f32 %v394, %v396
      %v398 = vadd.f32 %v394, %v397
      %vm399 = vweird.f32 %v377
      %vm400 = vweird.f32 %v394
      %vm401 = vmor %vm399, %vm400
      %v402 = vsel %vm401, %v394, %v398
      %v403 = vand.u32 2147483647, %v377
      %vm404 = vcmp.eq.f32.partialorder %v403, 8.507059e+37
      %v405 = vand.u32 %v377, 2147483648
      %v406 = vor.u32 1.1754944e-38, %v405
      %v407 = vsel %vm404, %v406, %v402
      %v408 = vmul.f32 1.0, %v407
      %v409 = vrcp.pop %v378
      %v410 = vmul.f32 %v378, %v409
      %v411 = vsub.f32 1.0, %v410
      %v412 = vmul.f32 %v409, %v411
      %v413 = vadd.f32 %v409, %v412
      %vm414 = vweird.f32 %v378
      %vm415 = vweird.f32 %v409
      %vm416 = vmor %vm414, %vm415
      %v417 = vsel %vm416, %v409, %v413
      %v418 = vand.u32 2147483647, %v378
      %vm419 = vcmp.eq.f32.partialorder %v418, 8.507059e+37
      %v420 = vand.u32 %v378, 2147483648
      %v421 = vor.u32 1.1754944e-38, %v420
      %v422 = vsel %vm419, %v421, %v417
      %v423 = vmul.f32 1.0, %v422
      %s424 = scalar_lea.vmem %s143, 4
      %425 = vst.msk [vmem:[%s424] ss:$8 sm:$0x3] %vm206, %v393
      %426 = vst.msk [vmem:[%s424] ss:$8 sm:$0x0] %vm206, %v393
      %s427 = scalar_lea.vmem %s143, 36
      %428 = vst.msk [vmem:[%s427] ss:$8 sm:$0x3] %vm206, %v408
      %429 = vst.msk [vmem:[%s427] ss:$8 sm:$0x0] %vm206, %v408
      %s430 = scalar_lea.vmem %s143, 68
      %431 = vst.msk [vmem:[%s430] ss:$8 sm:$0x3] %vm206, %v423
      %432 = vst.msk [vmem:[%s430] ss:$8 sm:$0x0] %vm206, %v423
      %v433 = vld [vmem:[%s138] sm:$0xe0]
      %v434 = vld [vmem:[%s138 + $0x8] sm:$0xe0]
      %v435 = vld [vmem:[%s138 + $0x10] sm:$0x1]
      %v436 = vld [vmem:[%s138 + $0x18] sm:$0x1]
      %v437 = vld [vmem:[%s138 + $0x20] sm:$0xe0]
      %v438 = vld [vmem:[%s138 + $0x28] sm:$0xe0]
      %v439 = vld [vmem:[%s138 + $0x30] sm:$0x1]
      %v440 = vld [vmem:[%s138 + $0x38] sm:$0x1]
      %v441 = vld [vmem:[%s138 + $0x40] sm:$0xe0]
      %v442 = vld [vmem:[%s138 + $0x48] sm:$0xe0]
      %v443 = vld [vmem:[%s138 + $0x50] sm:$0x1]
      %v444 = vld [vmem:[%s138 + $0x58] sm:$0x1]
      %445 = vst [vmem:[%s143] sm:$0xe0] %v433
      %446 = vst [vmem:[%s143 + $0x8] sm:$0xe0] %v434
      %447 = vst [vmem:[%s143 + $0x10] sm:$0x1] %v435
      %448 = vst [vmem:[%s143 + $0x18] sm:$0x1] %v436
      %449 = vst [vmem:[%s143 + $0x20] sm:$0xe0] %v437
      %450 = vst [vmem:[%s143 + $0x28] sm:$0xe0] %v438
      %451 = vst [vmem:[%s143 + $0x30] sm:$0x1] %v439
      %452 = vst [vmem:[%s143 + $0x38] sm:$0x1] %v440
      %453 = vst [vmem:[%s143 + $0x40] sm:$0xe0] %v441
      %454 = vst [vmem:[%s143 + $0x48] sm:$0xe0] %v442
      %455 = vst [vmem:[%s143 + $0x50] sm:$0x1] %v443
      %456 = vst [vmem:[%s143 + $0x58] sm:$0x1] %v444
      %p457 = scmp.lt.s32.totalorder %s13, 1
      %s458 = scalar_select %p457, %s13, 1
      %s459 = smul.addr %s458, 12
      %s460 = smul.addr %s459, 8
      %s461 = scalar_lea.vmem %s2, %s460
      // Predicated region
      $region29: #{yolo_head_forward.1} parent=27 // pred_check
        %p462 = pneg %p78
      $region30: #{yolo_head_forward.1} parent=27 // pred_check_branch
        %464 = sbr.rel (%p462) target = $region32
      $region31: #{yolo_head_forward.1} parent=27 // pred_region
        _
      $region32: #{yolo_head_forward.1} parent=27 // pred_fallthru
        _
    $region28: #{yolo_head_forward.1} parent=5 // pred_fallthru
      _
    %p465 = scmp.le.s32.totalorder 2, %s8
    // Predicated region
    $region33: #{yolo_head_forward.1} parent=5 // pred_check
      %p466 = pneg %p465
    $region34: #{yolo_head_forward.1} parent=5 // pred_check_branch
      %468 = sbr.rel (%p466) target = $region36
    $region35: #{yolo_head_forward.1} parent=5 // pred_region
      %s469 = ssub.s32 %s8, 2
      // Predicated region
      $region37: #{yolo_head_forward.1} parent=35 // pred_check
        %p470 = pneg %p84
      $region38: #{yolo_head_forward.1} parent=35 // pred_check_branch
        %472 = sbr.rel (%p470) target = $region40
      $region39: #{yolo_head_forward.1} parent=35 // pred_region
        %p473 = scmp.lt.s32.totalorder %s14, 1
        %s474 = scalar_select %p473, %s14, 1
        %s475 = smul.addr %s474, 12
        %s476 = smul.addr %s475, 8
        %s477 = scalar_lea.vmem %s2, %s476
      $region40: #{yolo_head_forward.1} parent=35 // pred_fallthru
        _
    $region36: #{yolo_head_forward.1} parent=5 // pred_fallthru
      _
  $region6: #{yolo_head_forward.1} parent=0 // loop_footer
    %s12 = sadd.s32 1, %s8
  $region7: #{yolo_head_forward.1} parent=0 // loop_footer_branch
    %7 = sbr.rel target = $region3
  $region8: #{yolo_head_forward.1} parent=0 // loop_exit
    _

</llo_original>
